<compile_context>
chip_gen: v5e
topology: v5e:2x2
jax: 0.10.0
libtpu: 0.0.40
codegen_flags: <defaults>
</compile_context>

<pallas_src>
import jax
import jax.numpy as jnp
from jax.experimental import pallas as pl
from jax.experimental.pallas import tpu as pltpu


def _round_up(x: int, m: int) -> int:
    return ((x + m - 1) // m) * m


def _outconv_kernel_small(w_ref, b_ref, x_ref, o_ref):
    """Tiny-channel path: sublane+lane dense VPU FMAs (no MXU).

    w_ref: (Cout, Cin) f32 SMEM      (scalar reads)
    b_ref: (Cout,)     f32 SMEM
    x_ref: (B, Cin,  TR, 128) VMEM   (TR*128 spatial elements per block)
    o_ref: (B, Cout, TR, 128) VMEM
    """
    cout, cin = w_ref.shape
    for co in range(cout):
        acc = x_ref[:, 0:1, :, :].astype(jnp.float32) * w_ref[co, 0] + b_ref[co]
        for ci in range(1, cin):
            acc = acc + w_ref[co, ci] * x_ref[:, ci:ci + 1, :, :].astype(jnp.float32)
        # Direct per-channel dense store (no concat / relayout).
        o_ref[:, co:co + 1, :, :] = jax.nn.sigmoid(acc).astype(o_ref.dtype)


def _outconv_kernel_mxu(w_ref, b_ref, x_ref, o_ref):
    """General path: (Cout, Cin) @ (Cin, T) on the MXU, f32 accumulate.

    w_ref: (Cout, Cin) VMEM, b_ref: (Cout, 1) f32 VMEM,
    x_ref: (Cin, T) VMEM, o_ref: (Cout, T) VMEM (T multiple of 128 -> dense stores).
    """
    acc = jnp.dot(w_ref[...], x_ref[...],
                  preferred_element_type=jnp.float32,
                  precision=jax.lax.Precision.HIGHEST)
    o_ref[...] = jax.nn.sigmoid(acc + b_ref[...]).astype(o_ref.dtype)


def outconv_forward(x_nchw, weight, bias, *,
                    tile_budget_bytes=2 * 1024 * 1024,
                    small_channel_limit=32):
    """sigmoid(conv2d(x, weight, bias, kernel_size=1)) for NCHW inputs.

    x_nchw: (N, Cin, H, W); weight: (Cout, Cin, 1, 1); bias: (Cout,).
    Returns (N, Cout, H, W) in x_nchw.dtype.
    """
    N, Cin, H, W = x_nchw.shape
    Cout = weight.shape[0]
    HW = H * W
    itemsize = jnp.dtype(x_nchw.dtype).itemsize
    out_dtype = x_nchw.dtype

    hw128 = _round_up(HW, 128)
    R = hw128 // 128                       # spatial rows of 128 lanes

    x_r = x_nchw.reshape(N, Cin, HW)       # free: contiguous, no transpose
    if hw128 != HW:
        x_r = jnp.pad(x_r, ((0, 0), (0, 0), (0, hw128 - HW)))

    small = Cin <= small_channel_limit and Cout <= small_channel_limit

    if small:
        # ---- VPU path: weights/bias in SMEM, spatial as (rows, 128) slabs ----
        w_arg = weight.reshape(Cout, Cin).astype(jnp.float32)
        b_arg = bias.astype(jnp.float32)
        w_spec = pl.BlockSpec(memory_space=pltpu.MemorySpace.SMEM)
        b_spec = pl.BlockSpec(memory_space=pltpu.MemorySpace.SMEM)
        kernel = _outconv_kernel_small

        # How many 128-lane spatial rows the budget allows per grid step.
        bytes_per_row = (Cin + Cout) * 128 * itemsize
        rows_max = max(1, tile_budget_bytes // bytes_per_row)

        if N * R <= rows_max:
            # Whole problem fits one block: fold the batch -> single grid step.
            x_r = x_r.reshape(N, Cin, R, 128)
            grid = (1,)
            x_spec = pl.BlockSpec((N, Cin, R, 128), lambda s: (0, 0, 0, 0))
            out_spec = pl.BlockSpec((N, Cout, R, 128), lambda s: (0, 0, 0, 0))
            out_shape = jax.ShapeDtypeStruct((N, Cout, R, 128), out_dtype)
            dims = ("arbitrary",)
        else:
            s_blocks = pl.cdiv(R, rows_max)
            if N == 1 and s_blocks == 1 and R >= 16:
                s_blocks = 2               # let v7x's 2nd TensorCore participate
            if s_blocks == 1:
                tr = R                     # full dim -> no (8,128) constraint
            else:
                tr = _round_up(pl.cdiv(R, s_blocks), 8)   # sublane-aligned tile
            r_pad = s_blocks * tr          # minimal padding (<= a few 8-row groups)
            if r_pad != R:
                x_r = jnp.pad(x_r, ((0, 0), (0, 0), (0, (r_pad - R) * 128)))
            x_r = x_r.reshape(N, Cin, r_pad, 128)
            grid = (N, s_blocks)
            x_spec = pl.BlockSpec((1, Cin, tr, 128), lambda n, s: (n, 0, s, 0))
            out_spec = pl.BlockSpec((1, Cout, tr, 128), lambda n, s: (n, 0, s, 0))
            out_shape = jax.ShapeDtypeStruct((N, Cout, r_pad, 128), out_dtype)
            dims = ("parallel", "parallel")
        args = (w_arg, b_arg, x_r)
    else:
        # ---- MXU path: (Cin, T)/(Cout, T) tiles, lane-dense output stores ----
        w_arg = weight.reshape(Cout, Cin).astype(x_nchw.dtype)
        b_arg = bias.reshape(Cout, 1).astype(jnp.float32)
        w_spec = pl.BlockSpec((Cout, Cin), lambda n, s: (0, 0))   # resident
        b_spec = pl.BlockSpec((Cout, 1), lambda n, s: (0, 0))     # resident
        kernel = _outconv_kernel_mxu

        lane_bytes = (Cin + Cout) * itemsize
        t_max = max(128, (tile_budget_bytes // lane_bytes) // 128 * 128)
        s_blocks = pl.cdiv(hw128, t_max)
        if N == 1 and s_blocks == 1 and hw128 >= 256:
            s_blocks = 2                   # keep both v7x cores busy
        t = _round_up(pl.cdiv(hw128, s_blocks), 128)
        hw_pad = s_blocks * t
        if hw_pad != hw128:
            x_r = jnp.pad(x_r, ((0, 0), (0, 0), (0, hw_pad - hw128)))
        grid = (N, s_blocks)
        x_spec = pl.BlockSpec((None, Cin, t), lambda n, s: (n, 0, s))
        out_spec = pl.BlockSpec((None, Cout, t), lambda n, s: (n, 0, s))
        out_shape = jax.ShapeDtypeStruct((N, Cout, hw_pad), out_dtype)
        dims = ("parallel", "parallel")
        args = (w_arg, b_arg, x_r)

    out = pl.pallas_call(
        kernel,
        out_shape=out_shape,
        grid_spec=pltpu.PrefetchScalarGridSpec(
            num_scalar_prefetch=0,
            grid=grid,
            in_specs=[w_spec, b_spec, x_spec],
            out_specs=out_spec,
        ),
        compiler_params=pltpu.CompilerParams(dimension_semantics=dims),
    )(*args)

    # Drop spatial padding (no-op when unpadded) and restore NCHW.
    return out.reshape(N, Cout, -1)[:, :, :HW].reshape(N, Cout, H, W)


def _reference(x, weight, bias):
    cout, cin = weight.shape[0], weight.shape[1]
    return jax.nn.sigmoid(
        jnp.einsum("nchw,oc->nohw", x, weight.reshape(cout, cin),
                   precision=jax.lax.Precision.HIGHEST)
        + bias[None, :, None, None]
    )


if __name__ == "__main__":
    key = jax.random.PRNGKey(0)
    kx, kw, kb, kx2, kw2, kb2 = jax.random.split(key, 6)

    # --- Primary: UNet OutConv shapes (tiny channels -> folded single-step VPU path)
    N, Cin, H, W, Cout = 2, 4, 16, 16, 3
    x = jax.random.normal(kx, (N, Cin, H, W), dtype=jnp.float32)
    k = 1.0 / jnp.sqrt(jnp.float32(Cin))   # nn.Conv2d default init: U(-k, k)
    weight = jax.random.uniform(kw, (Cout, Cin, 1, 1), minval=-k, maxval=k,
                                dtype=jnp.float32)
    bias = jax.random.uniform(kb, (Cout,), minval=-k, maxval=k, dtype=jnp.float32)

    out = outconv_forward(x, weight, bias)
    jax.block_until_ready(out)
    ref = _reference(x, weight, bias)
    assert out.shape == (N, Cout, H, W)
    assert jnp.allclose(out, ref, atol=1e-5, rtol=1e-5)

    # --- Same problem, tiny tile budget -> exercises the tiled (N, S) small path
    out_tiled = outconv_forward(x, weight, bias, tile_budget_bytes=4096)
    jax.block_until_ready(out_tiled)
    assert jnp.allclose(out_tiled, ref, atol=1e-5, rtol=1e-5)

    # --- Larger channels -> MXU path; HW not a multiple of 128
    N2, Cin2, H2, W2, Cout2 = 1, 64, 10, 10, 8
    x2 = jax.random.normal(kx2, (N2, Cin2, H2, W2), dtype=jnp.float32)
    k2 = 1.0 / jnp.sqrt(jnp.float32(Cin2))
    w2 = jax.random.uniform(kw2, (Cout2, Cin2, 1, 1), minval=-k2, maxval=k2,
                            dtype=jnp.float32)
    b2 = jax.random.uniform(kb2, (Cout2,), minval=-k2, maxval=k2, dtype=jnp.float32)

    out2 = outconv_forward(x2, w2, b2)
    jax.block_until_ready(out2)
    assert out2.shape == (N2, Cout2, H2, W2)
    # HIGHEST-precision MXU accumulation -> tight tolerance.
    assert jnp.allclose(out2, _reference(x2, w2, b2), atol=1e-4, rtol=1e-4)

    print("KERNEL_OK")
</pallas_src>

<mosaic_0001>
module attributes {stable_mosaic.version = 11 : i64} {
  func.func @_outconv_kernel_small(%arg0: i32, %arg1: memref<3x4xf32, #tpu.memory_space<smem>>, %arg2: memref<3xf32, #tpu.memory_space<smem>>, %arg3: memref<2x4x2x128xf32, #tpu.memory_space<vmem>>, %arg4: memref<2x3x2x128xf32, #tpu.memory_space<vmem>>) attributes {dimension_semantics = [#tpu.dimension_semantics<arbitrary>], iteration_bounds = array<i64: 1>, scalar_prefetch = 0 : i64, scratch_operands = 0 : i64, tpu.core_type = #tpu.core_type<tc>, window_params = [{transform_indices = @transform_0, window_bounds = array<i64: 3, 4>}, {transform_indices = @transform_1, window_bounds = array<i64: 3>}, {pipeline_mode = #tpu.pipeline_mode<synchronous>, transform_indices = @transform_2, window_bounds = array<i64: 2, 4, 2, 128>}, {pipeline_mode = #tpu.pipeline_mode<synchronous>, transform_indices = @transform_3, window_bounds = array<i64: 2, 3, 2, 128>}]} {
    %c0 = arith.constant 0 : index
    %c0_0 = arith.constant 0 : index
    %c0_1 = arith.constant 0 : index
    %c0_2 = arith.constant 0 : index
    %0 = vector.load %arg3[%c0, %c0_0, %c0_1, %c0_2] : memref<2x4x2x128xf32, #tpu.memory_space<vmem>>, vector<2x1x2x128xf32>
    %c0_3 = arith.constant 0 : index
    %c0_4 = arith.constant 0 : index
    %1 = memref.load %arg1[%c0_3, %c0_4] : memref<3x4xf32, #tpu.memory_space<smem>>
    %2 = vector.broadcast %1 : f32 to vector<2x1x2x128xf32>
    %3 = arith.mulf %0, %2 : vector<2x1x2x128xf32>
    %c0_5 = arith.constant 0 : index
    %4 = memref.load %arg2[%c0_5] : memref<3xf32, #tpu.memory_space<smem>>
    %5 = vector.broadcast %4 : f32 to vector<2x1x2x128xf32>
    %6 = arith.addf %3, %5 : vector<2x1x2x128xf32>
    %c0_6 = arith.constant 0 : index
    %c1 = arith.constant 1 : index
    %7 = memref.load %arg1[%c0_6, %c1] : memref<3x4xf32, #tpu.memory_space<smem>>
    %c0_7 = arith.constant 0 : index
    %c1_8 = arith.constant 1 : index
    %c0_9 = arith.constant 0 : index
    %c0_10 = arith.constant 0 : index
    %8 = vector.load %arg3[%c0_7, %c1_8, %c0_9, %c0_10] : memref<2x4x2x128xf32, #tpu.memory_space<vmem>>, vector<2x1x2x128xf32>
    %9 = vector.broadcast %7 : f32 to vector<2x1x2x128xf32>
    %10 = arith.mulf %9, %8 : vector<2x1x2x128xf32>
    %11 = arith.addf %6, %10 : vector<2x1x2x128xf32>
    %c0_11 = arith.constant 0 : index
    %c2 = arith.constant 2 : index
    %12 = memref.load %arg1[%c0_11, %c2] : memref<3x4xf32, #tpu.memory_space<smem>>
    %c0_12 = arith.constant 0 : index
    %c2_13 = arith.constant 2 : index
    %c0_14 = arith.constant 0 : index
    %c0_15 = arith.constant 0 : index
    %13 = vector.load %arg3[%c0_12, %c2_13, %c0_14, %c0_15] : memref<2x4x2x128xf32, #tpu.memory_space<vmem>>, vector<2x1x2x128xf32>
    %14 = vector.broadcast %12 : f32 to vector<2x1x2x128xf32>
    %15 = arith.mulf %14, %13 : vector<2x1x2x128xf32>
    %16 = arith.addf %11, %15 : vector<2x1x2x128xf32>
    %c0_16 = arith.constant 0 : index
    %c3 = arith.constant 3 : index
    %17 = memref.load %arg1[%c0_16, %c3] : memref<3x4xf32, #tpu.memory_space<smem>>
    %c0_17 = arith.constant 0 : index
    %c3_18 = arith.constant 3 : index
    %c0_19 = arith.constant 0 : index
    %c0_20 = arith.constant 0 : index
    %18 = vector.load %arg3[%c0_17, %c3_18, %c0_19, %c0_20] : memref<2x4x2x128xf32, #tpu.memory_space<vmem>>, vector<2x1x2x128xf32>
    %19 = vector.broadcast %17 : f32 to vector<2x1x2x128xf32>
    %20 = arith.mulf %19, %18 : vector<2x1x2x128xf32>
    %21 = arith.addf %16, %20 : vector<2x1x2x128xf32>
    %22 = arith.negf %21 : vector<2x1x2x128xf32>
    %23 = math.exp %22 : vector<2x1x2x128xf32>
    %cst = arith.constant 1.000000e+00 : f32
    %24 = vector.broadcast %cst : f32 to vector<2x1x2x128xf32>
    %25 = arith.addf %24, %23 : vector<2x1x2x128xf32>
    %26 = arith.divf %24, %25 : vector<2x1x2x128xf32>
    %c0_21 = arith.constant 0 : index
    %c0_22 = arith.constant 0 : index
    %c0_23 = arith.constant 0 : index
    %c0_24 = arith.constant 0 : index
    %27 = vector.load %arg4[%c0_21, %c0_22, %c0_23, %c0_24] : memref<2x3x2x128xf32, #tpu.memory_space<vmem>>, vector<2x1x2x128xf32>
    tpu.vector_store %arg4[%c0_21, %c0_22, %c0_23, %c0_24], %26 {strides = array<i32>} : memref<2x3x2x128xf32, #tpu.memory_space<vmem>>, vector<2x1x2x128xf32>,
    %c0_25 = arith.constant 0 : index
    %c0_26 = arith.constant 0 : index
    %c0_27 = arith.constant 0 : index
    %c0_28 = arith.constant 0 : index
    %28 = vector.load %arg3[%c0_25, %c0_26, %c0_27, %c0_28] : memref<2x4x2x128xf32, #tpu.memory_space<vmem>>, vector<2x1x2x128xf32>
    %c1_29 = arith.constant 1 : index
    %c0_30 = arith.constant 0 : index
    %29 = memref.load %arg1[%c1_29, %c0_30] : memref<3x4xf32, #tpu.memory_space<smem>>
    %30 = vector.broadcast %29 : f32 to vector<2x1x2x128xf32>
    %31 = arith.mulf %28, %30 : vector<2x1x2x128xf32>
    %c1_31 = arith.constant 1 : index
    %32 = memref.load %arg2[%c1_31] : memref<3xf32, #tpu.memory_space<smem>>
    %33 = vector.broadcast %32 : f32 to vector<2x1x2x128xf32>
    %34 = arith.addf %31, %33 : vector<2x1x2x128xf32>
    %c1_32 = arith.constant 1 : index
    %c1_33 = arith.constant 1 : index
    %35 = memref.load %arg1[%c1_32, %c1_33] : memref<3x4xf32, #tpu.memory_space<smem>>
    %c0_34 = arith.constant 0 : index
    %c1_35 = arith.constant 1 : index
    %c0_36 = arith.constant 0 : index
    %c0_37 = arith.constant 0 : index
    %36 = vector.load %arg3[%c0_34, %c1_35, %c0_36, %c0_37] : memref<2x4x2x128xf32, #tpu.memory_space<vmem>>, vector<2x1x2x128xf32>
    %37 = vector.broadcast %35 : f32 to vector<2x1x2x128xf32>
    %38 = arith.mulf %37, %36 : vector<2x1x2x128xf32>
    %39 = arith.addf %34, %38 : vector<2x1x2x128xf32>
    %c1_38 = arith.constant 1 : index
    %c2_39 = arith.constant 2 : index
    %40 = memref.load %arg1[%c1_38, %c2_39] : memref<3x4xf32, #tpu.memory_space<smem>>
    %c0_40 = arith.constant 0 : index
    %c2_41 = arith.constant 2 : index
    %c0_42 = arith.constant 0 : index
    %c0_43 = arith.constant 0 : index
    %41 = vector.load %arg3[%c0_40, %c2_41, %c0_42, %c0_43] : memref<2x4x2x128xf32, #tpu.memory_space<vmem>>, vector<2x1x2x128xf32>
    %42 = vector.broadcast %40 : f32 to vector<2x1x2x128xf32>
    %43 = arith.mulf %42, %41 : vector<2x1x2x128xf32>
    %44 = arith.addf %39, %43 : vector<2x1x2x128xf32>
    %c1_44 = arith.constant 1 : index
    %c3_45 = arith.constant 3 : index
    %45 = memref.load %arg1[%c1_44, %c3_45] : memref<3x4xf32, #tpu.memory_space<smem>>
    %c0_46 = arith.constant 0 : index
    %c3_47 = arith.constant 3 : index
    %c0_48 = arith.constant 0 : index
    %c0_49 = arith.constant 0 : index
    %46 = vector.load %arg3[%c0_46, %c3_47, %c0_48, %c0_49] : memref<2x4x2x128xf32, #tpu.memory_space<vmem>>, vector<2x1x2x128xf32>
    %47 = vector.broadcast %45 : f32 to vector<2x1x2x128xf32>
    %48 = arith.mulf %47, %46 : vector<2x1x2x128xf32>
    %49 = arith.addf %44, %48 : vector<2x1x2x128xf32>
    %50 = arith.negf %49 : vector<2x1x2x128xf32>
    %51 = math.exp %50 : vector<2x1x2x128xf32>
    %cst_50 = arith.constant 1.000000e+00 : f32
    %52 = vector.broadcast %cst_50 : f32 to vector<2x1x2x128xf32>
    %53 = arith.addf %52, %51 : vector<2x1x2x128xf32>
    %54 = arith.divf %52, %53 : vector<2x1x2x128xf32>
    %c0_51 = arith.constant 0 : index
    %c1_52 = arith.constant 1 : index
    %c0_53 = arith.constant 0 : index
    %c0_54 = arith.constant 0 : index
    %55 = vector.load %arg4[%c0_51, %c1_52, %c0_53, %c0_54] : memref<2x3x2x128xf32, #tpu.memory_space<vmem>>, vector<2x1x2x128xf32>
    tpu.vector_store %arg4[%c0_51, %c1_52, %c0_53, %c0_54], %54 {strides = array<i32>} : memref<2x3x2x128xf32, #tpu.memory_space<vmem>>, vector<2x1x2x128xf32>,
    %c0_55 = arith.constant 0 : index
    %c0_56 = arith.constant 0 : index
    %c0_57 = arith.constant 0 : index
    %c0_58 = arith.constant 0 : index
    %56 = vector.load %arg3[%c0_55, %c0_56, %c0_57, %c0_58] : memref<2x4x2x128xf32, #tpu.memory_space<vmem>>, vector<2x1x2x128xf32>
    %c2_59 = arith.constant 2 : index
    %c0_60 = arith.constant 0 : index
    %57 = memref.load %arg1[%c2_59, %c0_60] : memref<3x4xf32, #tpu.memory_space<smem>>
    %58 = vector.broadcast %57 : f32 to vector<2x1x2x128xf32>
    %59 = arith.mulf %56, %58 : vector<2x1x2x128xf32>
    %c2_61 = arith.constant 2 : index
    %60 = memref.load %arg2[%c2_61] : memref<3xf32, #tpu.memory_space<smem>>
    %61 = vector.broadcast %60 : f32 to vector<2x1x2x128xf32>
    %62 = arith.addf %59, %61 : vector<2x1x2x128xf32>
    %c2_62 = arith.constant 2 : index
    %c1_63 = arith.constant 1 : index
    %63 = memref.load %arg1[%c2_62, %c1_63] : memref<3x4xf32, #tpu.memory_space<smem>>
    %c0_64 = arith.constant 0 : index
    %c1_65 = arith.constant 1 : index
    %c0_66 = arith.constant 0 : index
    %c0_67 = arith.constant 0 : index
    %64 = vector.load %arg3[%c0_64, %c1_65, %c0_66, %c0_67] : memref<2x4x2x128xf32, #tpu.memory_space<vmem>>, vector<2x1x2x128xf32>
    %65 = vector.broadcast %63 : f32 to vector<2x1x2x128xf32>
    %66 = arith.mulf %65, %64 : vector<2x1x2x128xf32>
    %67 = arith.addf %62, %66 : vector<2x1x2x128xf32>
    %c2_68 = arith.constant 2 : index
    %c2_69 = arith.constant 2 : index
    %68 = memref.load %arg1[%c2_68, %c2_69] : memref<3x4xf32, #tpu.memory_space<smem>>
    %c0_70 = arith.constant 0 : index
    %c2_71 = arith.constant 2 : index
    %c0_72 = arith.constant 0 : index
    %c0_73 = arith.constant 0 : index
    %69 = vector.load %arg3[%c0_70, %c2_71, %c0_72, %c0_73] : memref<2x4x2x128xf32, #tpu.memory_space<vmem>>, vector<2x1x2x128xf32>
    %70 = vector.broadcast %68 : f32 to vector<2x1x2x128xf32>
    %71 = arith.mulf %70, %69 : vector<2x1x2x128xf32>
    %72 = arith.addf %67, %71 : vector<2x1x2x128xf32>
    %c2_74 = arith.constant 2 : index
    %c3_75 = arith.constant 3 : index
    %73 = memref.load %arg1[%c2_74, %c3_75] : memref<3x4xf32, #tpu.memory_space<smem>>
    %c0_76 = arith.constant 0 : index
    %c3_77 = arith.constant 3 : index
    %c0_78 = arith.constant 0 : index
    %c0_79 = arith.constant 0 : index
    %74 = vector.load %arg3[%c0_76, %c3_77, %c0_78, %c0_79] : memref<2x4x2x128xf32, #tpu.memory_space<vmem>>, vector<2x1x2x128xf32>
    %75 = vector.broadcast %73 : f32 to vector<2x1x2x128xf32>
    %76 = arith.mulf %75, %74 : vector<2x1x2x128xf32>
    %77 = arith.addf %72, %76 : vector<2x1x2x128xf32>
    %78 = arith.negf %77 : vector<2x1x2x128xf32>
    %79 = math.exp %78 : vector<2x1x2x128xf32>
    %cst_80 = arith.constant 1.000000e+00 : f32
    %80 = vector.broadcast %cst_80 : f32 to vector<2x1x2x128xf32>
    %81 = arith.addf %80, %79 : vector<2x1x2x128xf32>
    %82 = arith.divf %80, %81 : vector<2x1x2x128xf32>
    %c0_81 = arith.constant 0 : index
    %c2_82 = arith.constant 2 : index
    %c0_83 = arith.constant 0 : index
    %c0_84 = arith.constant 0 : index
    %83 = vector.load %arg4[%c0_81, %c2_82, %c0_83, %c0_84] : memref<2x3x2x128xf32, #tpu.memory_space<vmem>>, vector<2x1x2x128xf32>
    tpu.vector_store %arg4[%c0_81, %c2_82, %c0_83, %c0_84], %82 {strides = array<i32>} : memref<2x3x2x128xf32, #tpu.memory_space<vmem>>, vector<2x1x2x128xf32>,
    return
  }
  func.func @transform_0(%arg0: i32) -> (i32, i32) {
    %c0_i32 = arith.constant 0 : i32
    %c0_i32_0 = arith.constant 0 : i32
    %c0_i32_1 = arith.constant 0 : i32
    return %c0_i32, %c0_i32_0 : i32, i32
  }
  func.func @transform_1(%arg0: i32) -> i32 {
    %c0_i32 = arith.constant 0 : i32
    %c0_i32_0 = arith.constant 0 : i32
    return %c0_i32 : i32
  }
  func.func @transform_2(%arg0: i32) -> (i32, i32, i32, i32) {
    %c0_i32 = arith.constant 0 : i32
    %c0_i32_0 = arith.constant 0 : i32
    %c0_i32_1 = arith.constant 0 : i32
    %c0_i32_2 = arith.constant 0 : i32
    %c0_i32_3 = arith.constant 0 : i32
    return %c0_i32, %c0_i32_0, %c0_i32_1, %c0_i32_2 : i32, i32, i32, i32
  }
  func.func @transform_3(%arg0: i32) -> (i32, i32, i32, i32) {
    %c0_i32 = arith.constant 0 : i32
    %c0_i32_0 = arith.constant 0 : i32
    %c0_i32_1 = arith.constant 0 : i32
    %c0_i32_2 = arith.constant 0 : i32
    %c0_i32_3 = arith.constant 0 : i32
    return %c0_i32, %c0_i32_0, %c0_i32_1, %c0_i32_2 : i32, i32, i32, i32
  }
}

</mosaic_0001>

<llo_original>
// kernel: tpu_custom_call.1
$region0: #{tpu_custom_call.1}
  #allocation0 [shape = 'u32[]', space=smem, size = 0x4, offset = 0x4, fixed_abs, tag = 'smem constant byte address 0x4 - core index']
  #allocation1 [shape = 'u32[72,128]{1,0:T(1,128)}', space=vmem, size = 0x9000, scoped, tag = 'internal scratch']
  %s0 = inlined_call_operand.hbm [shape: f32[3,4], index: 0, kind: input, shape index: {}]
  %s1 = inlined_call_operand.hbm [shape: f32[3], index: 1, kind: input, shape index: {}]
  %s2 = inlined_call_operand.hbm [shape: f32[2,4,2,128], index: 2, kind: input, shape index: {}]
  %s3 = inlined_call_operand.hbm [shape: f32[2,3,2,128], index: 3, kind: output, shape index: {}]
  %s4 = sld [smem:[#allocation0]]
  $region34: #{tpu_custom_call.1} parent=0
    _
  %s6 = ssub.s32 1, %s4
  %s7 = scalar_select 0, %s6, %s4
  $region1: #{tpu_custom_call.1} parent=0
    #allocation2 [shape = 'u8[2048]{0}', space=smem, size = 0x800, scoped, tag = 'input window, operand 0, single buffered']
    #allocation3 [shape = 's32[1]{0}', space=sflag, size = 0x4, scoped, tag = 'scoped memory for tpu_custom_call.1']
    #allocation4 [shape = 's32[1]{0}', space=sflag, size = 0x4, scoped, tag = 'scoped memory for tpu_custom_call.1']
    #allocation5 [shape = 's32[1]{0}', space=sflag, size = 0x4, scoped, tag = 'scoped memory for tpu_custom_call.1']
    #allocation6 [shape = 'u8[512]{0}', space=smem, size = 0x200, scoped, tag = 'input window, operand 1, single buffered']
    #allocation7 [shape = 's32[1]{0}', space=sflag, size = 0x4, scoped, tag = 'scoped memory for tpu_custom_call.1']
    #allocation8 [shape = 'u8[8192]{0}', space=vmem, size = 0x2000, scoped, tag = 'input window, operand 2, single buffered']
    #allocation9 [shape = 'u8[6144]{0}', space=vmem, size = 0x1800, scoped, tag = 'output window, operand 0, single buffered']
    %8 = vsyncpa [#allocation5], 0
    %9 = vsyncpa [#allocation7], 0
    %10 = vsyncpa [#allocation3], 0
    %11 = vsyncpa [#allocation4], 0
    // Predicated region
    $region2: #{tpu_custom_call.1} parent=1 // pred_check
      _
    $region3: #{tpu_custom_call.1} parent=1 // pred_check_branch
      %13 = sbr.rel (0) target = $region5
    $region4: #{tpu_custom_call.1} parent=1 // pred_region
      %15 = vsyncadd [#allocation5], 0
      %s17 = sshll.u32 %s0, 4
      %s18 = int_to_ptr.hbm [resolvable:$true] %s17
      %20 = dma.hbm_to_smem %s18, 64, [#allocation2], [#allocation5]
    $region5: #{tpu_custom_call.1} parent=1 // pred_fallthru
      _
    // Predicated region
    $region6: #{tpu_custom_call.1} parent=1 // pred_check
      _
    $region7: #{tpu_custom_call.1} parent=1 // pred_check_branch
      %22 = sbr.rel (0) target = $region9
    $region8: #{tpu_custom_call.1} parent=1 // pred_region
      %24 = vsyncadd [#allocation7], 0
      %s26 = sshll.u32 %s1, 4
      %s27 = int_to_ptr.hbm [resolvable:$true] %s26
      %29 = dma.hbm_to_smem %s27, 16, [#allocation6], [#allocation7]
    $region9: #{tpu_custom_call.1} parent=1 // pred_fallthru
      _
    // Predicated region
    $region10: #{tpu_custom_call.1} parent=1 // pred_check
      _
    $region11: #{tpu_custom_call.1} parent=1 // pred_check_branch
      %31 = sbr.rel (0) target = $region13
    $region12: #{tpu_custom_call.1} parent=1 // pred_region
      %33 = vsyncadd [#allocation3], 0
      %s34 = sshll.u32 %s2, 4
      %s35 = int_to_ptr.hbm [resolvable:$true] %s34
      %s36 = sshll.u32 [#allocation8], 4
      %s37 = int_to_ptr.vmem [resolvable:$true] %s36
      %42 = dma.hbm_to_vmem [thread:$0]  %s35, 256, %s37, [#allocation3], 32, 32, 2
    $region13: #{tpu_custom_call.1} parent=1 // pred_fallthru
      _
    // Predicated region
    $region14: #{tpu_custom_call.1} parent=1 // pred_check
      _
    $region15: #{tpu_custom_call.1} parent=1 // pred_check_branch
      %44 = sbr.rel (0) target = $region17
    $region16: #{tpu_custom_call.1} parent=1 // pred_region
      %46 = dma.done [#allocation5], 64
    $region17: #{tpu_custom_call.1} parent=1 // pred_fallthru
      _
    // Predicated region
    $region18: #{tpu_custom_call.1} parent=1 // pred_check
      _
    $region19: #{tpu_custom_call.1} parent=1 // pred_check_branch
      %48 = sbr.rel (0) target = $region21
    $region20: #{tpu_custom_call.1} parent=1 // pred_region
      %50 = dma.done [#allocation7], 16
    $region21: #{tpu_custom_call.1} parent=1 // pred_fallthru
      _
    // Predicated region
    $region22: #{tpu_custom_call.1} parent=1 // pred_check
      _
    $region23: #{tpu_custom_call.1} parent=1 // pred_check_branch
      %52 = sbr.rel (0) target = $region25
    $region24: #{tpu_custom_call.1} parent=1 // pred_region
      %54 = dma.done [#allocation3], 256
    $region25: #{tpu_custom_call.1} parent=1 // pred_fallthru
      _
    %55 = sfence
    %v56 = vld [vmem:[#allocation8] sm:$0x3]
    %v57 = vld [vmem:[#allocation8 + $0x8] sm:$0x3]
    %s58 = sld [smem:[#allocation2]]
    %v59 = vstv %s58
    %v60 = vmul.f32 %v56, %v59
    %v61 = vmul.f32 %v57, %v59
    %s62 = sld [smem:[#allocation6]]
    %v63 = vstv %s62
    %v64 = vadd.f32 %v60, %v63
    %v65 = vadd.f32 %v61, %v63
    %s66 = sld [smem:[#allocation2 + $0x1]]
    %s67 = scalar_lea.vmem [#allocation8], 2
    %v68 = vld [vmem:[%s67] sm:$0x3]
    %v69 = vld [vmem:[%s67 + $0x8] sm:$0x3]
    %v70 = vstv %s66
    %v71 = vmul.f32 %v70, %v68
    %v72 = vmul.f32 %v70, %v69
    %v73 = vadd.f32 %v64, %v71
    %v74 = vadd.f32 %v65, %v72
    %s75 = sld [smem:[#allocation2 + $0x2]]
    %s76 = scalar_lea.vmem [#allocation8], 4
    %v77 = vld [vmem:[%s76] sm:$0x3]
    %v78 = vld [vmem:[%s76 + $0x8] sm:$0x3]
    %v79 = vstv %s75
    %v80 = vmul.f32 %v79, %v77
    %v81 = vmul.f32 %v79, %v78
    %v82 = vadd.f32 %v73, %v80
    %v83 = vadd.f32 %v74, %v81
    %s84 = sld [smem:[#allocation2 + $0x3]]
    %s85 = scalar_lea.vmem [#allocation8], 6
    %v86 = vld [vmem:[%s85] sm:$0x3]
    %v87 = vld [vmem:[%s85 + $0x8] sm:$0x3]
    %v88 = vstv %s84
    %v89 = vmul.f32 %v88, %v86
    %v90 = vmul.f32 %v88, %v87
    %v91 = vadd.f32 %v82, %v89
    %v92 = vadd.f32 %v83, %v90
    %v93 = vxor.u32 %v91, 2147483648
    %v94 = vxor.u32 %v92, 2147483648
    %v95 = vmul.f32 %v93, 1.442695
    %v96 = vpow.pop %v95
    %v97 = vmul.f32 %v94, 1.442695
    %v98 = vpow.pop %v97
    %v99 = vadd.f32 %v96, 1.0
    %v100 = vadd.f32 %v98, 1.0
    %v101 = vrcp.pop %v99
    %v102 = vmul.f32 %v99, %v101
    %v103 = vsub.f32 1.0, %v102
    %v104 = vmul.f32 %v101, %v103
    %v105 = vadd.f32 %v101, %v104
    %vm106 = vweird.f32 %v99
    %vm107 = vweird.f32 %v101
    %vm108 = vmor %vm106, %vm107
    %v109 = vsel %vm108, %v101, %v105
    %v110 = vand.u32 2147483647, %v99
    %vm111 = vcmp.eq.f32.partialorder %v110, 8.507059e+37
    %v112 = vand.u32 %v99, 2147483648
    %v113 = vor.u32 1.1754944e-38, %v112
    %v114 = vsel %vm111, %v113, %v109
    %v115 = vmul.f32 1.0, %v114
    %v116 = vrcp.pop %v100
    %v117 = vmul.f32 %v100, %v116
    %v118 = vsub.f32 1.0, %v117
    %v119 = vmul.f32 %v116, %v118
    %v120 = vadd.f32 %v116, %v119
    %vm121 = vweird.f32 %v100
    %vm122 = vweird.f32 %v116
    %vm123 = vmor %vm121, %vm122
    %v124 = vsel %vm123, %v116, %v120
    %v125 = vand.u32 2147483647, %v100
    %vm126 = vcmp.eq.f32.partialorder %v125, 8.507059e+37
    %v127 = vand.u32 %v100, 2147483648
    %v128 = vor.u32 1.1754944e-38, %v127
    %v129 = vsel %vm126, %v128, %v124
    %v130 = vmul.f32 1.0, %v129
    %131 = vst [vmem:[#allocation9] sm:$0x3] %v115
    %132 = vst [vmem:[#allocation9 + $0x6] sm:$0x3] %v130
    %v133 = vld [vmem:[#allocation8] sm:$0x3]
    %v134 = vld [vmem:[#allocation8 + $0x8] sm:$0x3]
    %s135 = sld [smem:[#allocation2 + $0x80]]
    %v136 = vstv %s135
    %v137 = vmul.f32 %v133, %v136
    %v138 = vmul.f32 %v134, %v136
    %s139 = sld [smem:[#allocation6 + $0x1]]
    %v140 = vstv %s139
    %v141 = vadd.f32 %v137, %v140
    %v142 = vadd.f32 %v138, %v140
    %s143 = sld [smem:[#allocation2 + $0x81]]
    %v144 = vld [vmem:[%s67] sm:$0x3]
    %v145 = vld [vmem:[%s67 + $0x8] sm:$0x3]
    %v146 = vstv %s143
    %v147 = vmul.f32 %v146, %v144
    %v148 = vmul.f32 %v146, %v145
    %v149 = vadd.f32 %v141, %v147
    %v150 = vadd.f32 %v142, %v148
    %s151 = sld [smem:[#allocation2 + $0x82]]
    %v152 = vld [vmem:[%s76] sm:$0x3]
    %v153 = vld [vmem:[%s76 + $0x8] sm:$0x3]
    %v154 = vstv %s151
    %v155 = vmul.f32 %v154, %v152
    %v156 = vmul.f32 %v154, %v153
    %v157 = vadd.f32 %v149, %v155
    %v158 = vadd.f32 %v150, %v156
    %s159 = sld [smem:[#allocation2 + $0x83]]
    %v160 = vld [vmem:[%s85] sm:$0x3]
    %v161 = vld [vmem:[%s85 + $0x8] sm:$0x3]
    %v162 = vstv %s159
    %v163 = vmul.f32 %v162, %v160
    %v164 = vmul.f32 %v162, %v161
    %v165 = vadd.f32 %v157, %v163
    %v166 = vadd.f32 %v158, %v164
    %v167 = vxor.u32 %v165, 2147483648
    %v168 = vxor.u32 %v166, 2147483648
    %v169 = vmul.f32 %v167, 1.442695
    %v170 = vpow.pop %v169
    %v171 = vmul.f32 %v168, 1.442695
    %v172 = vpow.pop %v171
    %v173 = vadd.f32 %v170, 1.0
    %v174 = vadd.f32 %v172, 1.0
    %v175 = vrcp.pop %v173
    %v176 = vmul.f32 %v173, %v175
    %v177 = vsub.f32 1.0, %v176
    %v178 = vmul.f32 %v175, %v177
    %v179 = vadd.f32 %v175, %v178
    %vm180 = vweird.f32 %v173
    %vm181 = vweird.f32 %v175
    %vm182 = vmor %vm180, %vm181
    %v183 = vsel %vm182, %v175, %v179
    %v184 = vand.u32 2147483647, %v173
    %vm185 = vcmp.eq.f32.partialorder %v184, 8.507059e+37
    %v186 = vand.u32 %v173, 2147483648
    %v187 = vor.u32 1.1754944e-38, %v186
    %v188 = vsel %vm185, %v187, %v183
    %v189 = vmul.f32 1.0, %v188
    %v190 = vrcp.pop %v174
    %v191 = vmul.f32 %v174, %v190
    %v192 = vsub.f32 1.0, %v191
    %v193 = vmul.f32 %v190, %v192
    %v194 = vadd.f32 %v190, %v193
    %vm195 = vweird.f32 %v174
    %vm196 = vweird.f32 %v190
    %vm197 = vmor %vm195, %vm196
    %v198 = vsel %vm197, %v190, %v194
    %v199 = vand.u32 2147483647, %v174
    %vm200 = vcmp.eq.f32.partialorder %v199, 8.507059e+37
    %v201 = vand.u32 %v174, 2147483648
    %v202 = vor.u32 1.1754944e-38, %v201
    %v203 = vsel %vm200, %v202, %v198
    %v204 = vmul.f32 1.0, %v203
    %s205 = scalar_lea.vmem [#allocation9], 2
    %206 = vst [vmem:[%s205] sm:$0x3] %v189
    %207 = vst [vmem:[%s205 + $0x6] sm:$0x3] %v204
    %v208 = vld [vmem:[#allocation8] sm:$0x3]
    %v209 = vld [vmem:[#allocation8 + $0x8] sm:$0x3]
    %s210 = sld [smem:[#allocation2 + $0x100]]
    %v211 = vstv %s210
    %v212 = vmul.f32 %v208, %v211
    %v213 = vmul.f32 %v209, %v211
    %s214 = sld [smem:[#allocation6 + $0x2]]
    %v215 = vstv %s214
    %v216 = vadd.f32 %v212, %v215
    %v217 = vadd.f32 %v213, %v215
    %s218 = sld [smem:[#allocation2 + $0x101]]
    %v219 = vld [vmem:[%s67] sm:$0x3]
    %v220 = vld [vmem:[%s67 + $0x8] sm:$0x3]
    %v221 = vstv %s218
    %v222 = vmul.f32 %v221, %v219
    %v223 = vmul.f32 %v221, %v220
    %v224 = vadd.f32 %v216, %v222
    %v225 = vadd.f32 %v217, %v223
    %s226 = sld [smem:[#allocation2 + $0x102]]
    %v227 = vld [vmem:[%s76] sm:$0x3]
    %v228 = vld [vmem:[%s76 + $0x8] sm:$0x3]
    %v229 = vstv %s226
    %v230 = vmul.f32 %v229, %v227
    %v231 = vmul.f32 %v229, %v228
    %v232 = vadd.f32 %v224, %v230
    %v233 = vadd.f32 %v225, %v231
    %s234 = sld [smem:[#allocation2 + $0x103]]
    %v235 = vld [vmem:[%s85] sm:$0x3]
    %v236 = vld [vmem:[%s85 + $0x8] sm:$0x3]
    %v237 = vstv %s234
    %v238 = vmul.f32 %v237, %v235
    %v239 = vmul.f32 %v237, %v236
    %v240 = vadd.f32 %v232, %v238
    %v241 = vadd.f32 %v233, %v239
    %v242 = vxor.u32 %v240, 2147483648
    %v243 = vxor.u32 %v241, 2147483648
    %v244 = vmul.f32 %v242, 1.442695
    %v245 = vpow.pop %v244
    %v246 = vmul.f32 %v243, 1.442695
    %v247 = vpow.pop %v246
    %v248 = vadd.f32 %v245, 1.0
    %v249 = vadd.f32 %v247, 1.0
    %v250 = vrcp.pop %v248
    %v251 = vmul.f32 %v248, %v250
    %v252 = vsub.f32 1.0, %v251
    %v253 = vmul.f32 %v250, %v252
    %v254 = vadd.f32 %v250, %v253
    %vm255 = vweird.f32 %v248
    %vm256 = vweird.f32 %v250
    %vm257 = vmor %vm255, %vm256
    %v258 = vsel %vm257, %v250, %v254
    %v259 = vand.u32 2147483647, %v248
    %vm260 = vcmp.eq.f32.partialorder %v259, 8.507059e+37
    %v261 = vand.u32 %v248, 2147483648
    %v262 = vor.u32 1.1754944e-38, %v261
    %v263 = vsel %vm260, %v262, %v258
    %v264 = vmul.f32 1.0, %v263
    %v265 = vrcp.pop %v249
    %v266 = vmul.f32 %v249, %v265
    %v267 = vsub.f32 1.0, %v266
    %v268 = vmul.f32 %v265, %v267
    %v269 = vadd.f32 %v265, %v268
    %vm270 = vweird.f32 %v249
    %vm271 = vweird.f32 %v265
    %vm272 = vmor %vm270, %vm271
    %v273 = vsel %vm272, %v265, %v269
    %v274 = vand.u32 2147483647, %v249
    %vm275 = vcmp.eq.f32.partialorder %v274, 8.507059e+37
    %v276 = vand.u32 %v249, 2147483648
    %v277 = vor.u32 1.1754944e-38, %v276
    %v278 = vsel %vm275, %v277, %v273
    %v279 = vmul.f32 1.0, %v278
    %s280 = scalar_lea.vmem [#allocation9], 4
    %281 = vst [vmem:[%s280] sm:$0x3] %v264
    %282 = vst [vmem:[%s280 + $0x6] sm:$0x3] %v279
    // Predicated region
    $region26: #{tpu_custom_call.1} parent=1 // pred_check
      _
    $region27: #{tpu_custom_call.1} parent=1 // pred_check_branch
      %284 = sbr.rel (0) target = $region29
    $region28: #{tpu_custom_call.1} parent=1 // pred_region
      %286 = vsyncadd [#allocation4], 0
      %s287 = sshll.u32 [#allocation9], 4
      %s288 = int_to_ptr.vmem [resolvable:$true] %s287
      %s289 = sshll.u32 %s3, 4
      %s290 = int_to_ptr.hbm [resolvable:$true] %s289
      %295 = dma.vmem_to_hbm [thread:$0]  %s288, 192, %s290, [#allocation4], 32, 32, 2
    $region29: #{tpu_custom_call.1} parent=1 // pred_fallthru
      _
    // Predicated region
    $region30: #{tpu_custom_call.1} parent=1 // pred_check
      _
    $region31: #{tpu_custom_call.1} parent=1 // pred_check_branch
      %297 = sbr.rel (0) target = $region33
    $region32: #{tpu_custom_call.1} parent=1 // pred_region
      %299 = dma.done [#allocation4], 192
    $region33: #{tpu_custom_call.1} parent=1 // pred_fallthru
      _
    %300 = vsyncpa [#allocation3], 1
    %301 = vsyncpa [#allocation4], 1
    %302 = vsyncpa [#allocation5], 1
    %303 = vsyncpa [#allocation7], 1

</llo_original>
